<compile_context>
chip_gen: v7x
topology: tpu7x:2x2x1
jax: 0.10.0
libtpu: 0.0.40
codegen_flags: <defaults>
</compile_context>

<pallas_src>
import jax
import jax.numpy as jnp
from jax import lax
from jax.experimental import pallas as pl
from jax.experimental.pallas import tpu as pltpu  # noqa: F401  (TPU backend)


def _self_attn_kernel(x_ref, wq_ref, wk_ref, wv_ref, o_ref):
    x = x_ref[...]  # (seq, d) f32

    # Projections: three small MXU pushes.  Weights are separate whole-tile
    # refs, so there are no mid-vreg lane slices / relayouts.
    q = jnp.dot(x, wq_ref[...], preferred_element_type=jnp.float32)
    k = jnp.dot(x, wk_ref[...], preferred_element_type=jnp.float32)
    v = jnp.dot(x, wv_ref[...], preferred_element_type=jnp.float32)

    # kv = K^T @ V : contract the seq axis of both operands -> (d, d).
    # No explicit transpose is materialized.
    kv = lax.dot_general(
        k, v,
        dimension_numbers=(((0,), (0,)), ((), ())),
        preferred_element_type=jnp.float32,
    )

    # The PyTorch module computes softmax(S / sqrt(d_k)) but never uses it for
    # the returned context_vector (it multiplies the raw attn_score by Value),
    # so S = Q K^T never has to be materialized:
    #   context = (Q K^T) V == Q (K^T V) = Q @ kv
    # TODO(synk): if upstream ever fixes the bug to use attn_weight, this
    #             reassociation is no longer valid; switch to a blocked
    #             online-softmax (flash-style) formulation instead.
    o_ref[...] = jnp.dot(q, kv, preferred_element_type=jnp.float32).astype(o_ref.dtype)


def self_attention_v1(x, w_q, w_k, w_v):
    seq, d = x.shape

    full = lambda shape: pl.BlockSpec(shape, lambda: (0,) * len(shape))

    # Advisory cost estimate (3 projections + K^T V + Q @ kv, all f32).
    flops = 3 * (2 * seq * d * d) + (2 * d * seq * d) + (2 * seq * d * d)
    bytes_accessed = 4 * (x.size + w_q.size + w_k.size + w_v.size + seq * d)

    return pl.pallas_call(
        _self_attn_kernel,
        out_shape=jax.ShapeDtypeStruct((seq, d), jnp.float32),
        grid=(),
        in_specs=[
            full((seq, d)),
            full((d, d)),
            full((d, d)),
            full((d, d)),
        ],
        out_specs=full((seq, d)),
        cost_estimate=pl.CostEstimate(
            flops=flops, transcendentals=0, bytes_accessed=bytes_accessed),
    )(x, w_q, w_k, w_v)


def _reference(x, w_q, w_k, w_v):
    q = x @ w_q
    k = x @ w_k
    v = x @ w_v
    s = q @ k.T
    return s @ v


if __name__ == "__main__":
    key = jax.random.PRNGKey(0)
    kx, kwq, kwk, kwv = jax.random.split(key, 4)

    seq, d_model = 8, 3  # matches nn.Parameter(torch.rand(3, 3)) weight shapes
    x = jax.random.uniform(kx, (seq, d_model), dtype=jnp.float32)
    # torch.rand -> uniform [0, 1)
    w_q = jax.random.uniform(kwq, (d_model, d_model), dtype=jnp.float32)
    w_k = jax.random.uniform(kwk, (d_model, d_model), dtype=jnp.float32)
    w_v = jax.random.uniform(kwv, (d_model, d_model), dtype=jnp.float32)

    out = jax.block_until_ready(self_attention_v1(x, w_q, w_k, w_v))

    ref = _reference(x, w_q, w_k, w_v)
    assert out.shape == (seq, d_model)
    # Reassociation changes summation order -> ULP-level differences only.
    assert jnp.allclose(out, ref, atol=1e-5, rtol=1e-5), "mismatch vs reference"

    print("KERNEL_OK")
</pallas_src>

<mosaic_0001>
module attributes {stable_mosaic.version = 11 : i64} {
  func.func @_self_attn_kernel(%arg0: memref<8x3xf32, #tpu.memory_space<vmem>>, %arg1: memref<3x3xf32, #tpu.memory_space<vmem>>, %arg2: memref<3x3xf32, #tpu.memory_space<vmem>>, %arg3: memref<3x3xf32, #tpu.memory_space<vmem>>, %arg4: memref<8x3xf32, #tpu.memory_space<vmem>>) attributes {dimension_semantics = [], scalar_prefetch = 0 : i64, scratch_operands = 0 : i64, tpu.core_type = #tpu.core_type<tc>} {
    %c0 = arith.constant 0 : index
    %c0_0 = arith.constant 0 : index
    %0 = vector.load %arg0[%c0, %c0_0] : memref<8x3xf32, #tpu.memory_space<vmem>>, vector<8x3xf32>
    %c0_1 = arith.constant 0 : index
    %c0_2 = arith.constant 0 : index
    %1 = vector.load %arg1[%c0_1, %c0_2] : memref<3x3xf32, #tpu.memory_space<vmem>>, vector<3x3xf32>
    %cst = arith.constant dense<0.000000e+00> : vector<8x3xf32>
    %2 = tpu.matmul %0, %1, %cst {dimension_numbers = #tpu.dot_dimension_numbers<[1], [0], [0], [1], [0, 0, 1, 1], [], []>} : vector<8x3xf32>, vector<3x3xf32>, vector<8x3xf32> -> vector<8x3xf32>
    %c0_3 = arith.constant 0 : index
    %c0_4 = arith.constant 0 : index
    %3 = vector.load %arg2[%c0_3, %c0_4] : memref<3x3xf32, #tpu.memory_space<vmem>>, vector<3x3xf32>
    %cst_5 = arith.constant dense<0.000000e+00> : vector<8x3xf32>
    %4 = tpu.matmul %0, %3, %cst_5 {dimension_numbers = #tpu.dot_dimension_numbers<[1], [0], [0], [1], [0, 0, 1, 1], [], []>} : vector<8x3xf32>, vector<3x3xf32>, vector<8x3xf32> -> vector<8x3xf32>
    %c0_6 = arith.constant 0 : index
    %c0_7 = arith.constant 0 : index
    %5 = vector.load %arg3[%c0_6, %c0_7] : memref<3x3xf32, #tpu.memory_space<vmem>>, vector<3x3xf32>
    %cst_8 = arith.constant dense<0.000000e+00> : vector<8x3xf32>
    %6 = tpu.matmul %0, %5, %cst_8 {dimension_numbers = #tpu.dot_dimension_numbers<[1], [0], [0], [1], [0, 0, 1, 1], [], []>} : vector<8x3xf32>, vector<3x3xf32>, vector<8x3xf32> -> vector<8x3xf32>
    %cst_9 = arith.constant dense<0.000000e+00> : vector<3x3xf32>
    %7 = tpu.matmul %4, %6, %cst_9 {dimension_numbers = #tpu.dot_dimension_numbers<[0], [0], [1], [1], [0, 1, 1, 1], [], []>} : vector<8x3xf32>, vector<8x3xf32>, vector<3x3xf32> -> vector<3x3xf32>
    %cst_10 = arith.constant dense<0.000000e+00> : vector<8x3xf32>
    %8 = tpu.matmul %2, %7, %cst_10 {dimension_numbers = #tpu.dot_dimension_numbers<[1], [0], [0], [1], [0, 0, 1, 1], [], []>} : vector<8x3xf32>, vector<3x3xf32>, vector<8x3xf32> -> vector<8x3xf32>
    %c0_11 = arith.constant 0 : index
    %c0_12 = arith.constant 0 : index
    %9 = vector.load %arg4[%c0_11, %c0_12] : memref<8x3xf32, #tpu.memory_space<vmem>>, vector<8x3xf32>
    tpu.vector_store %arg4[%c0_11, %c0_12], %8 {strides = array<i32>} : memref<8x3xf32, #tpu.memory_space<vmem>>, vector<8x3xf32>,
    return
  }
}

</mosaic_0001>

<llo_original>
// kernel: tpu_custom_call.1
$region0: #{tpu_custom_call.1}
  #allocation0 [shape = 'u32[]', space=smem, size = 0x4, offset = 0x4, fixed_abs, tag = 'smem constant byte address 0x4 - core index']
  #allocation1 [shape = 'u32[144,128]{1,0:T(1,128)}', space=vmem, size = 0x12000, scoped, tag = 'internal scratch']
  %s0 = inlined_call_operand.vmem [shape: f32[8,3], index: 0, kind: input, shape index: {}]
  %s1 = inlined_call_operand.vmem [shape: f32[3,3], index: 1, kind: input, shape index: {}]
  %s2 = inlined_call_operand.vmem [shape: f32[3,3], index: 2, kind: input, shape index: {}]
  %s3 = inlined_call_operand.vmem [shape: f32[3,3], index: 3, kind: input, shape index: {}]
  %s4 = inlined_call_operand.vmem [shape: f32[8,3], index: 4, kind: output, shape index: {}]
  %s5 = sld [smem:[#allocation0]]
  $region26: #{tpu_custom_call.1} parent=0
    _
  %s7 = ssub.s32 1, %s5
  %s8 = scalar_select 0, %s7, %s5
  // Predicated region
  $region2: #{tpu_custom_call.1} parent=0 // pred_check
    _
  $region3: #{tpu_custom_call.1} parent=0 // pred_check_branch
    %10 = sbr.rel (0) target = $region5
  $region4: #{tpu_custom_call.1} parent=0 // pred_region
    _
  $region5: #{tpu_custom_call.1} parent=0 // pred_fallthru
    _
  // Predicated region
  $region6: #{tpu_custom_call.1} parent=0 // pred_check
    _
  $region7: #{tpu_custom_call.1} parent=0 // pred_check_branch
    %12 = sbr.rel (0) target = $region9
  $region8: #{tpu_custom_call.1} parent=0 // pred_region
    _
  $region9: #{tpu_custom_call.1} parent=0 // pred_fallthru
    _
  // Predicated region
  $region10: #{tpu_custom_call.1} parent=0 // pred_check
    _
  $region11: #{tpu_custom_call.1} parent=0 // pred_check_branch
    %14 = sbr.rel (0) target = $region13
  $region12: #{tpu_custom_call.1} parent=0 // pred_region
    _
  $region13: #{tpu_custom_call.1} parent=0 // pred_fallthru
    _
  // Predicated region
  $region14: #{tpu_custom_call.1} parent=0 // pred_check
    _
  $region15: #{tpu_custom_call.1} parent=0 // pred_check_branch
    %16 = sbr.rel (0) target = $region17
  $region16: #{tpu_custom_call.1} parent=0 // pred_region
    _
  $region17: #{tpu_custom_call.1} parent=0 // pred_fallthru
    _
  %v17 = vld [vmem:[%s0] sm:$0xff]
  %v18 = vld [vmem:[%s1] sm:$0x7]
  %vm19 = vcmask 23552
  %v21 = vsel %vm19, %v17, 0
  %vm23 = vcmask 1042432
  %v25 = vsel %vm23, %v18, 0
  %27 = vmatprep.subr.mxu0 0.0
  %28 = vmatpush1.msra.mxu0 %v25
  %29 = vmatprep.subr.mxu0 0.0
  %30 = vmatpush1.msra.mxu0 0.0
  %31 = vmatprep.subr.mxu0 0.0
  %32 = vmatpush1.msra.mxu0 0.0
  %33 = vmatprep.subr.mxu0 0.0
  %34 = vmatpush1.msra.mxu0 0.0
  %35 = vmatprep.subr.mxu0 0.0
  %36 = vmatpush1.msra.mxu0 0.0
  %37 = vmatprep.subr.mxu0 0.0
  %38 = vmatpush1.msra.mxu0 0.0
  %39 = vmatprep.subr.mxu0 0.0
  %40 = vmatpush1.msra.mxu0 0.0
  %41 = vmatprep.subr.mxu0 0.0
  %42 = vmatpush1.msra.mxu0 0.0
  %43 = vmatprep.subr.mxu0 0.0
  %44 = vmatpush1.msra.mxu0 0.0
  %45 = vmatprep.subr.mxu0 0.0
  %46 = vmatpush1.msra.mxu0 0.0
  %47 = vmatprep.subr.mxu0 0.0
  %48 = vmatpush1.msra.mxu0 0.0
  %49 = vmatprep.subr.mxu0 0.0
  %50 = vmatpush1.msra.mxu0 0.0
  %51 = vmatprep.subr.mxu0 0.0
  %52 = vmatpush1.msra.mxu0 0.0
  %53 = vmatprep.subr.mxu0 0.0
  %54 = vmatpush1.msra.mxu0 0.0
  %55 = vmatprep.subr.mxu0 0.0
  %56 = vmatpush1.msra.mxu0 0.0
  %57 = vmatprep.subr.mxu0 0.0
  %58 = vmatpush1.msra.mxu0 0.0
  %59 = vmatprep.subr.mxu0 0.0
  %60 = vmatpush1.msra.mxu0 0.0
  %61 = vmatprep.subr.mxu0 0.0
  %62 = vmatpush1.msra.mxu0 0.0
  %63 = vmatprep.subr.mxu0 0.0
  %64 = vmatpush1.msra.mxu0 0.0
  %65 = vmatprep.subr.mxu0 0.0
  %66 = vmatpush1.msra.mxu0 0.0
  %67 = vmatprep.subr.mxu0 0.0
  %68 = vmatpush1.msra.mxu0 0.0
  %69 = vmatprep.subr.mxu0 0.0
  %70 = vmatpush1.msra.mxu0 0.0
  %71 = vmatprep.subr.mxu0 0.0
  %72 = vmatpush1.msra.mxu0 0.0
  %73 = vmatprep.subr.mxu0 0.0
  %74 = vmatpush1.msra.mxu0 0.0
  %75 = vmatprep.subr.mxu0 0.0
  %76 = vmatpush1.msra.mxu0 0.0
  %77 = vmatprep.subr.mxu0 0.0
  %78 = vmatpush1.msra.mxu0 0.0
  %79 = vmatprep.subr.mxu0 0.0
  %80 = vmatpush1.msra.mxu0 0.0
  %81 = vmatprep.subr.mxu0 0.0
  %82 = vmatpush1.msra.mxu0 0.0
  %83 = vmatprep.subr.mxu0 0.0
  %84 = vmatpush1.msra.mxu0 0.0
  %85 = vmatprep.subr.mxu0 0.0
  %86 = vmatpush1.msra.mxu0 0.0
  %87 = vmatprep.subr.mxu0 0.0
  %88 = vmatpush1.msra.mxu0 0.0
  %89 = vmatprep.subr.mxu0 0.0
  %90 = vmatpush1.msra.mxu0 0.0
  %91 = vmatprep.mubr.f32.mxu0 0.0
  %92 = vmatmul.mubr.f32.gmra.mrb[0].mxu0 %v21
  %v93 = vpop.f32.mrb[0].mxu0
  %v94 = vadd.f32 0.0, %v93
  %v95 = vpop.f32.mrb[0].mxu0
  %96 = vdwg.mxu0
  %v97 = vld [vmem:[%s2] sm:$0x7]
  %v99 = vsel %vm23, %v97, 0
  %101 = vmatprep.subr.mxu0 0.0
  %102 = vmatpush1.msra.mxu0 %v99
  %103 = vmatprep.subr.mxu0 0.0
  %104 = vmatpush1.msra.mxu0 0.0
  %105 = vmatprep.subr.mxu0 0.0
  %106 = vmatpush1.msra.mxu0 0.0
  %107 = vmatprep.subr.mxu0 0.0
  %108 = vmatpush1.msra.mxu0 0.0
  %109 = vmatprep.subr.mxu0 0.0
  %110 = vmatpush1.msra.mxu0 0.0
  %111 = vmatprep.subr.mxu0 0.0
  %112 = vmatpush1.msra.mxu0 0.0
  %113 = vmatprep.subr.mxu0 0.0
  %114 = vmatpush1.msra.mxu0 0.0
  %115 = vmatprep.subr.mxu0 0.0
  %116 = vmatpush1.msra.mxu0 0.0
  %117 = vmatprep.subr.mxu0 0.0
  %118 = vmatpush1.msra.mxu0 0.0
  %119 = vmatprep.subr.mxu0 0.0
  %120 = vmatpush1.msra.mxu0 0.0
  %121 = vmatprep.subr.mxu0 0.0
  %122 = vmatpush1.msra.mxu0 0.0
  %123 = vmatprep.subr.mxu0 0.0
  %124 = vmatpush1.msra.mxu0 0.0
  %125 = vmatprep.subr.mxu0 0.0
  %126 = vmatpush1.msra.mxu0 0.0
  %127 = vmatprep.subr.mxu0 0.0
  %128 = vmatpush1.msra.mxu0 0.0
  %129 = vmatprep.subr.mxu0 0.0
  %130 = vmatpush1.msra.mxu0 0.0
  %131 = vmatprep.subr.mxu0 0.0
  %132 = vmatpush1.msra.mxu0 0.0
  %133 = vmatprep.subr.mxu0 0.0
  %134 = vmatpush1.msra.mxu0 0.0
  %135 = vmatprep.subr.mxu0 0.0
  %136 = vmatpush1.msra.mxu0 0.0
  %137 = vmatprep.subr.mxu0 0.0
  %138 = vmatpush1.msra.mxu0 0.0
  %139 = vmatprep.subr.mxu0 0.0
  %140 = vmatpush1.msra.mxu0 0.0
  %141 = vmatprep.subr.mxu0 0.0
  %142 = vmatpush1.msra.mxu0 0.0
  %143 = vmatprep.subr.mxu0 0.0
  %144 = vmatpush1.msra.mxu0 0.0
  %145 = vmatprep.subr.mxu0 0.0
  %146 = vmatpush1.msra.mxu0 0.0
  %147 = vmatprep.subr.mxu0 0.0
  %148 = vmatpush1.msra.mxu0 0.0
  %149 = vmatprep.subr.mxu0 0.0
  %150 = vmatpush1.msra.mxu0 0.0
  %151 = vmatprep.subr.mxu0 0.0
  %152 = vmatpush1.msra.mxu0 0.0
  %153 = vmatprep.subr.mxu0 0.0
  %154 = vmatpush1.msra.mxu0 0.0
  %155 = vmatprep.subr.mxu0 0.0
  %156 = vmatpush1.msra.mxu0 0.0
  %157 = vmatprep.subr.mxu0 0.0
  %158 = vmatpush1.msra.mxu0 0.0
  %159 = vmatprep.subr.mxu0 0.0
  %160 = vmatpush1.msra.mxu0 0.0
  %161 = vmatprep.subr.mxu0 0.0
  %162 = vmatpush1.msra.mxu0 0.0
  %163 = vmatprep.subr.mxu0 0.0
  %164 = vmatpush1.msra.mxu0 0.0
  %165 = vmatprep.mubr.f32.mxu0 0.0
  %166 = vmatmul.mubr.f32.gmra.mrb[0].mxu0 %v21
  %v167 = vpop.f32.mrb[0].mxu0
  %v168 = vadd.f32 0.0, %v167
  %v169 = vpop.f32.mrb[0].mxu0
  %170 = vdwg.mxu0
  %v171 = vld [vmem:[%s3] sm:$0x7]
  %v173 = vsel %vm23, %v171, 0
  %175 = vmatprep.subr.mxu0 0.0
  %176 = vmatpush1.msra.mxu0 %v173
  %177 = vmatprep.subr.mxu0 0.0
  %178 = vmatpush1.msra.mxu0 0.0
  %179 = vmatprep.subr.mxu0 0.0
  %180 = vmatpush1.msra.mxu0 0.0
  %181 = vmatprep.subr.mxu0 0.0
  %182 = vmatpush1.msra.mxu0 0.0
  %183 = vmatprep.subr.mxu0 0.0
  %184 = vmatpush1.msra.mxu0 0.0
  %185 = vmatprep.subr.mxu0 0.0
  %186 = vmatpush1.msra.mxu0 0.0
  %187 = vmatprep.subr.mxu0 0.0
  %188 = vmatpush1.msra.mxu0 0.0
  %189 = vmatprep.subr.mxu0 0.0
  %190 = vmatpush1.msra.mxu0 0.0
  %191 = vmatprep.subr.mxu0 0.0
  %192 = vmatpush1.msra.mxu0 0.0
  %193 = vmatprep.subr.mxu0 0.0
  %194 = vmatpush1.msra.mxu0 0.0
  %195 = vmatprep.subr.mxu0 0.0
  %196 = vmatpush1.msra.mxu0 0.0
  %197 = vmatprep.subr.mxu0 0.0
  %198 = vmatpush1.msra.mxu0 0.0
  %199 = vmatprep.subr.mxu0 0.0
  %200 = vmatpush1.msra.mxu0 0.0
  %201 = vmatprep.subr.mxu0 0.0
  %202 = vmatpush1.msra.mxu0 0.0
  %203 = vmatprep.subr.mxu0 0.0
  %204 = vmatpush1.msra.mxu0 0.0
  %205 = vmatprep.subr.mxu0 0.0
  %206 = vmatpush1.msra.mxu0 0.0
  %207 = vmatprep.subr.mxu0 0.0
  %208 = vmatpush1.msra.mxu0 0.0
  %209 = vmatprep.subr.mxu0 0.0
  %210 = vmatpush1.msra.mxu0 0.0
  %211 = vmatprep.subr.mxu0 0.0
  %212 = vmatpush1.msra.mxu0 0.0
  %213 = vmatprep.subr.mxu0 0.0
  %214 = vmatpush1.msra.mxu0 0.0
  %215 = vmatprep.subr.mxu0 0.0
  %216 = vmatpush1.msra.mxu0 0.0
  %217 = vmatprep.subr.mxu0 0.0
  %218 = vmatpush1.msra.mxu0 0.0
  %219 = vmatprep.subr.mxu0 0.0
  %220 = vmatpush1.msra.mxu0 0.0
  %221 = vmatprep.subr.mxu0 0.0
  %222 = vmatpush1.msra.mxu0 0.0
  %223 = vmatprep.subr.mxu0 0.0
  %224 = vmatpush1.msra.mxu0 0.0
  %225 = vmatprep.subr.mxu0 0.0
  %226 = vmatpush1.msra.mxu0 0.0
  %227 = vmatprep.subr.mxu0 0.0
  %228 = vmatpush1.msra.mxu0 0.0
  %229 = vmatprep.subr.mxu0 0.0
  %230 = vmatpush1.msra.mxu0 0.0
  %231 = vmatprep.subr.mxu0 0.0
  %232 = vmatpush1.msra.mxu0 0.0
  %233 = vmatprep.subr.mxu0 0.0
  %234 = vmatpush1.msra.mxu0 0.0
  %235 = vmatprep.subr.mxu0 0.0
  %236 = vmatpush1.msra.mxu0 0.0
  %237 = vmatprep.subr.mxu0 0.0
  %238 = vmatpush1.msra.mxu0 0.0
  %239 = vmatprep.mubr.f32.mxu0 0.0
  %240 = vmatmul.mubr.f32.gmra.mrb[0].mxu0 %v21
  %v241 = vpop.f32.mrb[0].mxu0
  %v242 = vadd.f32 0.0, %v241
  %v243 = vpop.f32.mrb[0].mxu0
  %244 = vdwg.mxu0
  %245 = vxpose.xlu0.b32.start [1/16] %v168, 128
  %246 = vxpose.xlu0.b32.cont [2/16] 0.0, 128
  %247 = vxpose.xlu0.b32.cont [3/16] 0.0, 128
  %248 = vxpose.xlu0.b32.cont [4/16] 0.0, 128
  %249 = vxpose.xlu0.b32.cont [5/16] 0.0, 128
  %250 = vxpose.xlu0.b32.cont [6/16] 0.0, 128
  %251 = vxpose.xlu0.b32.cont [7/16] 0.0, 128
  %252 = vxpose.xlu0.b32.cont [8/16] 0.0, 128
  %253 = vxpose.xlu0.b32.cont [9/16] 0.0, 128
  %254 = vxpose.xlu0.b32.cont [10/16] 0.0, 128
  %255 = vxpose.xlu0.b32.cont [11/16] 0.0, 128
  %256 = vxpose.xlu0.b32.cont [12/16] 0.0, 128
  %257 = vxpose.xlu0.b32.cont [13/16] 0.0, 128
  %258 = vxpose.xlu0.b32.cont [14/16] 0.0, 128
  %259 = vxpose.xlu0.b32.cont [15/16] 0.0, 128
  %260 = vxpose.xlu0.b32.end [16/16] 0.0, 128
  %v261 = vpop.trf.xlu0
  %v262 = vpop.trf.xlu0
  %v263 = vpop.trf.xlu0
  %v264 = vpop.trf.xlu0
  %v265 = vpop.trf.xlu0
  %v266 = vpop.trf.xlu0
  %v267 = vpop.trf.xlu0
  %v268 = vpop.trf.xlu0
  %v269 = vpop.trf.xlu0
  %v270 = vpop.trf.xlu0
  %v271 = vpop.trf.xlu0
  %v272 = vpop.trf.xlu0
  %v273 = vpop.trf.xlu0
  %v274 = vpop.trf.xlu0
  %v275 = vpop.trf.xlu0
  %v276 = vpop.trf.xlu0
  %vm277 = vcmask 64512
  %v279 = vsel %vm277, %v261, 0
  %281 = vmatprep.subr.mxu0 0.0
  %282 = vmatpush1.msra.mxu0 %v242
  %283 = vmatprep.subr.mxu0 0.0
  %284 = vmatpush1.msra.mxu0 0.0
  %285 = vmatprep.subr.mxu0 0.0
  %286 = vmatpush1.msra.mxu0 0.0
  %287 = vmatprep.subr.mxu0 0.0
  %288 = vmatpush1.msra.mxu0 0.0
  %289 = vmatprep.subr.mxu0 0.0
  %290 = vmatpush1.msra.mxu0 0.0
  %291 = vmatprep.subr.mxu0 0.0
  %292 = vmatpush1.msra.mxu0 0.0
  %293 = vmatprep.subr.mxu0 0.0
  %294 = vmatpush1.msra.mxu0 0.0
  %295 = vmatprep.subr.mxu0 0.0
  %296 = vmatpush1.msra.mxu0 0.0
  %297 = vmatprep.subr.mxu0 0.0
  %298 = vmatpush1.msra.mxu0 0.0
  %299 = vmatprep.subr.mxu0 0.0
  %300 = vmatpush1.msra.mxu0 0.0
  %301 = vmatprep.subr.mxu0 0.0
  %302 = vmatpush1.msra.mxu0 0.0
  %303 = vmatprep.subr.mxu0 0.0
  %304 = vmatpush1.msra.mxu0 0.0
  %305 = vmatprep.subr.mxu0 0.0
  %306 = vmatpush1.msra.mxu0 0.0
  %307 = vmatprep.subr.mxu0 0.0
  %308 = vmatpush1.msra.mxu0 0.0
  %309 = vmatprep.subr.mxu0 0.0
  %310 = vmatpush1.msra.mxu0 0.0
  %311 = vmatprep.subr.mxu0 0.0
  %312 = vmatpush1.msra.mxu0 0.0
  %313 = vmatprep.subr.mxu0 0.0
  %314 = vmatpush1.msra.mxu0 0.0
  %315 = vmatprep.subr.mxu0 0.0
  %316 = vmatpush1.msra.mxu0 0.0
  %317 = vmatprep.subr.mxu0 0.0
  %318 = vmatpush1.msra.mxu0 0.0
  %319 = vmatprep.subr.mxu0 0.0
  %320 = vmatpush1.msra.mxu0 0.0
  %321 = vmatprep.subr.mxu0 0.0
  %322 = vmatpush1.msra.mxu0 0.0
  %323 = vmatprep.subr.mxu0 0.0
  %324 = vmatpush1.msra.mxu0 0.0
  %325 = vmatprep.subr.mxu0 0.0
  %326 = vmatpush1.msra.mxu0 0.0
  %327 = vmatprep.subr.mxu0 0.0
  %328 = vmatpush1.msra.mxu0 0.0
  %329 = vmatprep.subr.mxu0 0.0
  %330 = vmatpush1.msra.mxu0 0.0
  %331 = vmatprep.subr.mxu0 0.0
  %332 = vmatpush1.msra.mxu0 0.0
  %333 = vmatprep.subr.mxu0 0.0
  %334 = vmatpush1.msra.mxu0 0.0
  %335 = vmatprep.subr.mxu0 0.0
  %336 = vmatpush1.msra.mxu0 0.0
  %337 = vmatprep.subr.mxu0 0.0
  %338 = vmatpush1.msra.mxu0 0.0
  %339 = vmatprep.subr.mxu0 0.0
  %340 = vmatpush1.msra.mxu0 0.0
  %341 = vmatprep.subr.mxu0 0.0
  %342 = vmatpush1.msra.mxu0 0.0
  %343 = vmatprep.subr.mxu0 0.0
  %344 = vmatpush1.msra.mxu0 0.0
  %345 = vmatprep.mubr.f32.mxu0 0.0
  %346 = vmatmul.mubr.f32.gmra.mrb[0].mxu0 %v279
  %v347 = vpop.f32.mrb[0].mxu0
  %v348 = vadd.f32 0.0, %v347
  %v349 = vpop.f32.mrb[0].mxu0
  %350 = vdwg.mxu0
  %v352 = vsel %vm19, %v94, 0
  %v355 = vsel %vm23, %v348, 0
  %357 = vmatprep.subr.mxu0 0.0
  %358 = vmatpush1.msra.mxu0 %v355
  %359 = vmatprep.subr.mxu0 0.0
  %360 = vmatpush1.msra.mxu0 0.0
  %361 = vmatprep.subr.mxu0 0.0
  %362 = vmatpush1.msra.mxu0 0.0
  %363 = vmatprep.subr.mxu0 0.0
  %364 = vmatpush1.msra.mxu0 0.0
  %365 = vmatprep.subr.mxu0 0.0
  %366 = vmatpush1.msra.mxu0 0.0
  %367 = vmatprep.subr.mxu0 0.0
  %368 = vmatpush1.msra.mxu0 0.0
  %369 = vmatprep.subr.mxu0 0.0
  %370 = vmatpush1.msra.mxu0 0.0
  %371 = vmatprep.subr.mxu0 0.0
  %372 = vmatpush1.msra.mxu0 0.0
  %373 = vmatprep.subr.mxu0 0.0
  %374 = vmatpush1.msra.mxu0 0.0
  %375 = vmatprep.subr.mxu0 0.0
  %376 = vmatpush1.msra.mxu0 0.0
  %377 = vmatprep.subr.mxu0 0.0
  %378 = vmatpush1.msra.mxu0 0.0
  %379 = vmatprep.subr.mxu0 0.0
  %380 = vmatpush1.msra.mxu0 0.0
  %381 = vmatprep.subr.mxu0 0.0
  %382 = vmatpush1.msra.mxu0 0.0
  %383 = vmatprep.subr.mxu0 0.0
  %384 = vmatpush1.msra.mxu0 0.0
  %385 = vmatprep.subr.mxu0 0.0
  %386 = vmatpush1.msra.mxu0 0.0
  %387 = vmatprep.subr.mxu0 0.0
  %388 = vmatpush1.msra.mxu0 0.0
  %389 = vmatprep.subr.mxu0 0.0
  %390 = vmatpush1.msra.mxu0 0.0
  %391 = vmatprep.subr.mxu0 0.0
  %392 = vmatpush1.msra.mxu0 0.0
  %393 = vmatprep.subr.mxu0 0.0
  %394 = vmatpush1.msra.mxu0 0.0
  %395 = vmatprep.subr.mxu0 0.0
  %396 = vmatpush1.msra.mxu0 0.0
  %397 = vmatprep.subr.mxu0 0.0
  %398 = vmatpush1.msra.mxu0 0.0
  %399 = vmatprep.subr.mxu0 0.0
  %400 = vmatpush1.msra.mxu0 0.0
  %401 = vmatprep.subr.mxu0 0.0
  %402 = vmatpush1.msra.mxu0 0.0
  %403 = vmatprep.subr.mxu0 0.0
  %404 = vmatpush1.msra.mxu0 0.0
  %405 = vmatprep.subr.mxu0 0.0
  %406 = vmatpush1.msra.mxu0 0.0
  %407 = vmatprep.subr.mxu0 0.0
  %408 = vmatpush1.msra.mxu0 0.0
  %409 = vmatprep.subr.mxu0 0.0
  %410 = vmatpush1.msra.mxu0 0.0
  %411 = vmatprep.subr.mxu0 0.0
  %412 = vmatpush1.msra.mxu0 0.0
  %413 = vmatprep.subr.mxu0 0.0
  %414 = vmatpush1.msra.mxu0 0.0
  %415 = vmatprep.subr.mxu0 0.0
  %416 = vmatpush1.msra.mxu0 0.0
  %417 = vmatprep.subr.mxu0 0.0
  %418 = vmatpush1.msra.mxu0 0.0
  %419 = vmatprep.subr.mxu0 0.0
  %420 = vmatpush1.msra.mxu0 0.0
  %421 = vmatprep.mubr.f32.mxu0 0.0
  %422 = vmatmul.mubr.f32.gmra.mrb[0].mxu0 %v352
  %v423 = vpop.f32.mrb[0].mxu0
  %v424 = vadd.f32 0.0, %v423
  %v425 = vpop.f32.mrb[0].mxu0
  %426 = vdwg.mxu0
  %427 = vst.msk [vmem:[%s4] sm:$0xff] %vm19, %v424
  // Predicated region
  $region18: #{tpu_custom_call.1} parent=0 // pred_check
    _
  $region19: #{tpu_custom_call.1} parent=0 // pred_check_branch
    %429 = sbr.rel (0) target = $region21
  $region20: #{tpu_custom_call.1} parent=0 // pred_region
    _
  $region21: #{tpu_custom_call.1} parent=0 // pred_fallthru
    _
  // Predicated region
  $region22: #{tpu_custom_call.1} parent=0 // pred_check
    _
  $region23: #{tpu_custom_call.1} parent=0 // pred_check_branch
    %431 = sbr.rel (0) target = $region25
  $region24: #{tpu_custom_call.1} parent=0 // pred_region
    _
  $region25: #{tpu_custom_call.1} parent=0 // pred_fallthru
    _

</llo_original>
